<compile_context>
chip_gen: v5e
topology: v5e:2x2
jax: 0.10.0
libtpu: 0.0.40
codegen_flags: <defaults>
</compile_context>

<pallas_src>
import functools
import math

import jax
import jax.numpy as jnp
from jax.experimental import pallas as pl
from jax.experimental.pallas import tpu as pltpu

EPS = 1e-5

# Below this many input bytes, plain XLA fusion beats per-grid-step overhead (~0.35 us/step).
_MIN_BYTES_FOR_PALLAS = 1 << 20  # 1 MiB

# Sublane packing of the second-to-last dim per element size (f32 / bf16 / int8).
_SUBLANE_PACK = {4: 8, 2: 16, 1: 32}

# Keep the software pipeline fed (and let v7x shard the parallel axis across 2 TCs).
_MIN_GRID_STEPS = 8


def _layer_norm_ref(x, gamma, beta, eps=EPS):
    """Pure-JAX reference / tiny-shape fallback (same math as the PyTorch module)."""
    x32 = x.astype(jnp.float32)
    mean = jnp.mean(x32, axis=-1, keepdims=True)
    var = jnp.mean(jnp.square(x32 - mean), axis=-1, keepdims=True)  # unbiased=False
    y = (gamma.astype(jnp.float32) * (x32 - mean) * jax.lax.rsqrt(var + eps)
         + beta.astype(jnp.float32))
    return y.astype(x.dtype)


# ---------------------------------------------------------------------------
# Kernels
# ---------------------------------------------------------------------------
def _layernorm_kernel(x_ref, gamma_ref, beta_ref, o_ref, *, eps, inv_f):
    """Direct row-tiled path. Single-pass stats + folded affine.

    Rows are independent; the reduction is over the lane axis (XLU), rsqrt on the EUP.
    Only ~3 live full-width f32 values (x, scale, shift) -> small vreg/VMEM pressure.
    """
    x = x_ref[...]
    if x.dtype != jnp.float32:
        x = x.astype(jnp.float32)
    inv_f = jnp.float32(inv_f)
    mean = jnp.sum(x, axis=-1, keepdims=True) * inv_f              # (tb, 1)
    ex2 = jnp.sum(x * x, axis=-1, keepdims=True) * inv_f           # (tb, 1)
    var = jnp.maximum(ex2 - mean * mean, 0.0)                      # biased variance
    inv_std = jax.lax.rsqrt(var + jnp.float32(eps))                # EUP rsqrt (free slot)
    gamma = gamma_ref[...]
    beta = beta_ref[...]
    if gamma.dtype != jnp.float32:
        gamma = gamma.astype(jnp.float32)
    if beta.dtype != jnp.float32:
        beta = beta.astype(jnp.float32)
    scale = gamma * inv_std                                        # (tb, F)
    shift = beta - mean * scale                                    # (tb, F)
    o_ref[...] = (x * scale + shift).astype(o_ref.dtype)


def _packed_layernorm_kernel(x_ref, selT_ref, gamma_ref, beta_ref, o_ref, *, eps, inv_f):
    """Lane-packed path for F not a multiple of 128.

    x_ref is (tb, G*F): G logical rows folded into the lane axis (G*F % 128 == 0), so
    all loads/stores are unmasked full-lane ops. Per-row (segmented) sums/broadcasts
    are done on the otherwise-idle MXU with a 0/1 selector matrix selT (G, G*F).
    gamma/beta arrive pre-tiled G times: (1, G*F).
    """
    x = x_ref[...]
    if x.dtype != jnp.float32:
        x = x.astype(jnp.float32)
    selT = selT_ref[...]                                           # (G, GF) f32 0/1
    inv_f = jnp.float32(inv_f)
    # Segmented sums: (tb, GF) . (G, GF)^T -> (tb, G)
    dn = (((1,), (1,)), ((), ()))
    sums = jax.lax.dot_general(x, selT, dn, preferred_element_type=jnp.float32)
    sumsq = jax.lax.dot_general(x * x, selT, dn, preferred_element_type=jnp.float32)
    mean = sums * inv_f                                            # (tb, G)
    var = jnp.maximum(sumsq * inv_f - mean * mean, 0.0)
    inv_std = jax.lax.rsqrt(var + jnp.float32(eps))                # (tb, G)
    # Broadcast per-segment scalars back across lanes: (tb, G) @ (G, GF) -> (tb, GF)
    mean_full = jnp.dot(mean, selT, preferred_element_type=jnp.float32)
    inv_std_full = jnp.dot(inv_std, selT, preferred_element_type=jnp.float32)
    scale = inv_std_full * gamma_ref[...]
    o_ref[...] = ((x - mean_full) * scale + beta_ref[...]).astype(o_ref.dtype)


# ---------------------------------------------------------------------------
# Tiling helpers
# ---------------------------------------------------------------------------
def _vmem_limit_bytes():
    """~3/4 of physical VMEM for the current generation (v5e/v6e: 128 MiB, v7x: 64 MiB)."""
    try:
        info = pltpu.get_tpu_info()
        cap = getattr(info, "vmem_capacity_bytes", None)
        if cap is None:
            return None
        return int(cap * 3 // 4)
    except Exception:
        return None


def _pick_block_rows(B, row_width, in_itemsize, out_itemsize, vmem_budget_bytes,
                     step_in_bytes_target):
    """Row tile sized by bytes-per-step (amortize ~0.35us/step), clamped by the VMEM
    budget, sublane packing, and a minimum number of grid steps for pipelining."""
    pack = _SUBLANE_PACK.get(min(in_itemsize, out_itemsize), 8)
    # Double-buffered input + double-buffered output + ~3 live full-width f32 temporaries.
    bytes_per_row = row_width * (2 * in_itemsize + 2 * out_itemsize + 3 * 4)
    # TODO(synk): add an F-tiled two-stage (partial sum/sumsq accumulate + finalize) path
    # when even `pack` rows of the full feature width exceed the VMEM budget (very wide F).
    max_rows_budget = max(vmem_budget_bytes // bytes_per_row, pack)
    target_rows = max(step_in_bytes_target // (row_width * in_itemsize), pack)
    br = min(max_rows_budget, target_rows, B)
    # Never emit a 1-step grid for a big problem: keep >= _MIN_GRID_STEPS steps when the
    # sublane-pack constraint allows it (else at least 2 steps).
    if (B // _MIN_GRID_STEPS) >= pack:
        br = min(br, (B // _MIN_GRID_STEPS) // pack * pack)
    elif (B // 2) >= pack:
        br = min(br, (B // 2) // pack * pack)
    br = max(pack, (br // pack) * pack)
    if br >= B:
        return B  # tiny problem: single block == full array dims (always legal)
    # Prefer an even division of B so there is no ragged trailing block.
    cand = br
    while cand > pack and B % cand != 0:
        cand -= pack
    if cand >= pack and B % cand == 0 and cand >= br // 2:
        return cand
    return br  # ragged last block: Pallas masks out-of-bounds rows on read/write


# ---------------------------------------------------------------------------
# Public entry point
# ---------------------------------------------------------------------------
def custom_layer_norm(x, gamma=None, beta=None, *, eps=EPS, block_rows=None,
                      force_pallas=False):
    """LayerNorm over the last axis, matching CustomLayerNorm.forward.

    Accepts any leading batch dims; normalization is over the trailing `features` axis.
    gamma/beta of None mirror elementwise_affine=False (identity affine).
    """
    orig_shape = x.shape
    F = orig_shape[-1]
    if gamma is None:
        gamma = jnp.ones((F,), dtype=x.dtype)
    if beta is None:
        beta = jnp.zeros((F,), dtype=x.dtype)

    x2 = x.reshape(-1, F)
    B = x2.shape[0]
    out_dtype = x.dtype
    in_b = x2.dtype.itemsize
    out_b = jnp.dtype(out_dtype).itemsize

    total_bytes = x2.size * in_b
    if not force_pallas and total_bytes < _MIN_BYTES_FOR_PALLAS:
        # Tiny input: kernel launch + pipeline prologue dominate; let XLA fuse it.
        return _layer_norm_ref(x, gamma, beta, eps)

    vmem_limit = _vmem_limit_bytes()
    vmem_budget = int((vmem_limit if vmem_limit is not None else (32 << 20)) * 0.85)
    # Per-step input-bytes target: bigger steps on 128-MiB-VMEM chips (v5e/v6e),
    # smaller on v7x (64 MiB physical, but 3.2 TB/s HBM finishes each step faster).
    step_target = (8 << 20) if (vmem_limit is not None and vmem_limit >= (64 << 20)) \
        else (4 << 20)

    # --- Lane-packed path for F that is not a multiple of 128 --------------------------
    use_packed = False
    G = 1
    if F % 128 != 0:
        G = 128 // math.gcd(F, 128)
        use_packed = (G > 1 and B % G == 0 and G <= 64 and G * F <= 4096)

    if use_packed:
        GF = G * F
        Bp = B // G
        xp = x2.reshape(Bp, GF)  # free row-major reshape: G rows per packed lane-row
        seg = jnp.arange(GF, dtype=jnp.int32) // F
        selT = (seg[None, :] == jnp.arange(G, dtype=jnp.int32)[:, None]).astype(jnp.float32)
        gammaT = jnp.tile(gamma.astype(jnp.float32).reshape(-1), (G,)).reshape(1, GF)
        betaT = jnp.tile(beta.astype(jnp.float32).reshape(-1), (G,)).reshape(1, GF)
        resident_bytes = (G + 2) * GF * 4  # selector + tiled gamma/beta stay resident

        if block_rows is None:
            br = _pick_block_rows(Bp, GF, in_b, out_b,
                                  max(vmem_budget - resident_bytes, 1 << 20), step_target)
        else:
            br = min(block_rows, Bp)
        grid = (pl.cdiv(Bp, br),)

        cost = pl.CostEstimate(
            flops=int(Bp * GF * (8 * G + 8)),
            transcendentals=int(B),
            bytes_accessed=int(Bp * GF * (in_b + out_b) + resident_bytes),
        )

        outp = pl.pallas_call(
            functools.partial(_packed_layernorm_kernel, eps=float(eps), inv_f=1.0 / F),
            out_shape=jax.ShapeDtypeStruct((Bp, GF), out_dtype),
            grid_spec=pltpu.PrefetchScalarGridSpec(
                num_scalar_prefetch=0,
                grid=grid,
                in_specs=[
                    pl.BlockSpec((br, GF), lambda i: (i, 0)),   # packed x (pipelined)
                    pl.BlockSpec((G, GF), lambda i: (0, 0)),    # selector (resident)
                    pl.BlockSpec((1, GF), lambda i: (0, 0)),    # tiled gamma (resident)
                    pl.BlockSpec((1, GF), lambda i: (0, 0)),    # tiled beta  (resident)
                ],
                out_specs=pl.BlockSpec((br, GF), lambda i: (i, 0)),
            ),
            compiler_params=pltpu.CompilerParams(
                dimension_semantics=("parallel",),
                vmem_limit_bytes=vmem_limit,
            ),
            cost_estimate=cost,
        )(xp, selT, gammaT, betaT)
        return outp.reshape(B, F).reshape(orig_shape)

    # --- Direct row-tiled path (lane-dense whenever F % 128 == 0) ----------------------
    gamma2d = gamma.reshape(1, F)
    beta2d = beta.reshape(1, F)

    if block_rows is None:
        br = _pick_block_rows(B, F, in_b, out_b, vmem_budget, step_target)
    else:
        br = min(block_rows, B)
    grid = (pl.cdiv(B, br),)

    cost = pl.CostEstimate(
        flops=int(8 * B * F),
        transcendentals=int(B),
        bytes_accessed=int(B * F * (in_b + out_b) + 2 * F * 4),
    )

    # TODO(synk): when F % 128 != 0 and the packing divisibility conditions above fail
    # (e.g. B not a multiple of G), stores here are masked vst.msk; a ragged-G segmented
    # path would recover full lane density.
    out2 = pl.pallas_call(
        functools.partial(_layernorm_kernel, eps=float(eps), inv_f=1.0 / F),
        out_shape=jax.ShapeDtypeStruct((B, F), out_dtype),
        grid_spec=pltpu.PrefetchScalarGridSpec(
            num_scalar_prefetch=0,
            grid=grid,
            in_specs=[
                pl.BlockSpec((br, F), lambda i: (i, 0)),  # x tile (pipelined)
                pl.BlockSpec((1, F), lambda i: (0, 0)),   # gamma (resident)
                pl.BlockSpec((1, F), lambda i: (0, 0)),   # beta  (resident)
            ],
            out_specs=pl.BlockSpec((br, F), lambda i: (i, 0)),
        ),
        compiler_params=pltpu.CompilerParams(
            dimension_semantics=("parallel",),
            vmem_limit_bytes=vmem_limit,
        ),
        cost_estimate=cost,
    )(x2, gamma2d, beta2d)
    return out2.reshape(orig_shape)


if __name__ == "__main__":
    key = jax.random.PRNGKey(0)
    k1, k2, k3 = jax.random.split(key, 3)

    # Case 1: the module example shape (batch_size=8, seq_len=features=10).
    B1, F1 = 8, 10
    x1 = jax.random.normal(k1, (B1, F1), dtype=jnp.float32)
    g1 = jnp.ones((F1,), dtype=jnp.float32)   # nn.Parameter(torch.ones)
    b1 = jnp.zeros((F1,), dtype=jnp.float32)  # nn.Parameter(torch.zeros)
    o1 = jax.block_until_ready(custom_layer_norm(x1, g1, b1, force_pallas=True))
    assert o1.shape == x1.shape
    assert jnp.allclose(o1, _layer_norm_ref(x1, g1, b1), atol=1e-4, rtol=1e-4), \
        "mismatch (module-example case)"

    # Case 2: lane-dense direct path (F % 128 == 0), multi-step pipelined grid.
    B2, F2 = 512, 256
    x2 = jax.random.normal(k2, (B2, F2), dtype=jnp.float32)
    g2 = 1.0 + 0.1 * jax.random.normal(k2, (F2,), dtype=jnp.float32)
    b2 = 0.1 * jax.random.normal(k2, (F2,), dtype=jnp.float32)
    o2 = jax.block_until_ready(custom_layer_norm(x2, g2, b2, force_pallas=True))
    assert jnp.allclose(o2, _layer_norm_ref(x2, g2, b2), atol=1e-4, rtol=1e-4), \
        "mismatch (lane-dense case)"

    # Case 3: lane-packed path (F=80 -> G=8 rows folded into the 128-lane axis).
    B3, F3 = 128, 80
    x3 = jax.random.normal(k3, (B3, F3), dtype=jnp.float32)
    g3 = 1.0 + 0.1 * jax.random.normal(k3, (F3,), dtype=jnp.float32)
    b3 = 0.1 * jax.random.normal(k3, (F3,), dtype=jnp.float32)
    o3 = jax.block_until_ready(custom_layer_norm(x3, g3, b3, force_pallas=True))
    assert jnp.allclose(o3, _layer_norm_ref(x3, g3, b3), atol=1e-4, rtol=1e-4), \
        "mismatch (lane-packed case)"

    print("KERNEL_OK")
</pallas_src>

<mosaic_0001>
module attributes {stable_mosaic.version = 11 : i64} {
  func.func @_layernorm_kernel(%arg0: i32, %arg1: memref<8x10xf32, #tpu.memory_space<vmem>>, %arg2: memref<1x10xf32, #tpu.memory_space<vmem>>, %arg3: memref<1x10xf32, #tpu.memory_space<vmem>>, %arg4: memref<8x10xf32, #tpu.memory_space<vmem>>) attributes {dimension_semantics = [#tpu.dimension_semantics<parallel>], iteration_bounds = array<i64: 1>, scalar_prefetch = 0 : i64, scratch_operands = 0 : i64, tpu.core_type = #tpu.core_type<tc>, window_params = [{transform_indices = @transform_0, window_bounds = array<i64: 8, 10>}, {pipeline_mode = #tpu.pipeline_mode<synchronous>, transform_indices = @transform_1, window_bounds = array<i64: 1, 10>}, {pipeline_mode = #tpu.pipeline_mode<synchronous>, transform_indices = @transform_2, window_bounds = array<i64: 1, 10>}, {transform_indices = @transform_3, window_bounds = array<i64: 8, 10>}]} {
    %c0 = arith.constant 0 : index
    %c0_0 = arith.constant 0 : index
    %0 = vector.load %arg1[%c0, %c0_0] : memref<8x10xf32, #tpu.memory_space<vmem>>, vector<8x10xf32>
    %cst = arith.constant dense<0.000000e+00> : vector<8xf32>
    %1 = vector.multi_reduction <add>, %0, %cst [1] : vector<8x10xf32> to vector<8xf32>
    %2 = vector.shape_cast %1 : vector<8xf32> to vector<8x1xf32>
    %cst_1 = arith.constant 1.000000e-01 : f32
    %3 = vector.broadcast %cst_1 : f32 to vector<8x1xf32>
    %4 = arith.mulf %2, %3 : vector<8x1xf32>
    %5 = arith.mulf %0, %0 : vector<8x10xf32>
    %cst_2 = arith.constant dense<0.000000e+00> : vector<8xf32>
    %6 = vector.multi_reduction <add>, %5, %cst_2 [1] : vector<8x10xf32> to vector<8xf32>
    %7 = vector.shape_cast %6 : vector<8xf32> to vector<8x1xf32>
    %cst_3 = arith.constant 1.000000e-01 : f32
    %8 = vector.broadcast %cst_3 : f32 to vector<8x1xf32>
    %9 = arith.mulf %7, %8 : vector<8x1xf32>
    %10 = arith.mulf %4, %4 : vector<8x1xf32>
    %11 = arith.subf %9, %10 : vector<8x1xf32>
    %cst_4 = arith.constant 0.000000e+00 : f32
    %12 = vector.broadcast %cst_4 : f32 to vector<8x1xf32>
    %13 = arith.maximumf %11, %12 : vector<8x1xf32>
    %cst_5 = arith.constant 9.99999974E-6 : f32
    %14 = vector.broadcast %cst_5 : f32 to vector<8x1xf32>
    %15 = arith.addf %13, %14 : vector<8x1xf32>
    %16 = math.rsqrt %15 : vector<8x1xf32>
    %c0_6 = arith.constant 0 : index
    %c0_7 = arith.constant 0 : index
    %17 = vector.load %arg2[%c0_6, %c0_7] : memref<1x10xf32, #tpu.memory_space<vmem>>, vector<1x10xf32>
    %c0_8 = arith.constant 0 : index
    %c0_9 = arith.constant 0 : index
    %18 = vector.load %arg3[%c0_8, %c0_9] : memref<1x10xf32, #tpu.memory_space<vmem>>, vector<1x10xf32>
    %19 = vector.broadcast %17 : vector<1x10xf32> to vector<8x10xf32>
    %20 = vector.broadcast %16 : vector<8x1xf32> to vector<8x10xf32>
    %21 = arith.mulf %19, %20 : vector<8x10xf32>
    %22 = vector.broadcast %4 : vector<8x1xf32> to vector<8x10xf32>
    %23 = arith.mulf %22, %21 : vector<8x10xf32>
    %24 = vector.broadcast %18 : vector<1x10xf32> to vector<8x10xf32>
    %25 = arith.subf %24, %23 : vector<8x10xf32>
    %26 = arith.mulf %0, %21 : vector<8x10xf32>
    %27 = arith.addf %26, %25 : vector<8x10xf32>
    %c0_10 = arith.constant 0 : index
    %c0_11 = arith.constant 0 : index
    %28 = vector.load %arg4[%c0_10, %c0_11] : memref<8x10xf32, #tpu.memory_space<vmem>>, vector<8x10xf32>
    tpu.vector_store %arg4[%c0_10, %c0_11], %27 {strides = array<i32>} : memref<8x10xf32, #tpu.memory_space<vmem>>, vector<8x10xf32>,
    return
  }
  func.func @transform_0(%arg0: i32) -> (i32, i32) {
    %c0_i32 = arith.constant 0 : i32
    %c0_i32_0 = arith.constant 0 : i32
    return %arg0, %c0_i32 : i32, i32
  }
  func.func @transform_1(%arg0: i32) -> (i32, i32) {
    %c0_i32 = arith.constant 0 : i32
    %c0_i32_0 = arith.constant 0 : i32
    %c0_i32_1 = arith.constant 0 : i32
    return %c0_i32, %c0_i32_0 : i32, i32
  }
  func.func @transform_2(%arg0: i32) -> (i32, i32) {
    %c0_i32 = arith.constant 0 : i32
    %c0_i32_0 = arith.constant 0 : i32
    %c0_i32_1 = arith.constant 0 : i32
    return %c0_i32, %c0_i32_0 : i32, i32
  }
  func.func @transform_3(%arg0: i32) -> (i32, i32) {
    %c0_i32 = arith.constant 0 : i32
    %c0_i32_0 = arith.constant 0 : i32
    return %arg0, %c0_i32 : i32, i32
  }
}

</mosaic_0001>

<llo_original>
// kernel: tpu_custom_call.1
$region0: #{tpu_custom_call.1}
  #allocation0 [shape = 'u32[]', space=smem, size = 0x4, offset = 0x4, fixed_abs, tag = 'smem constant byte address 0x4 - core index']
  #allocation1 [shape = 'u32[72,128]{1,0:T(1,128)}', space=vmem, size = 0x9000, scoped, tag = 'internal scratch']
  %s0 = inlined_call_operand.hbm [shape: f32[8,10], index: 0, kind: input, shape index: {}]
  %s1 = inlined_call_operand.hbm [shape: f32[1,10], index: 1, kind: input, shape index: {}]
  %s2 = inlined_call_operand.vmem [shape: f32[1,10], index: 2, kind: input, shape index: {}]
  %s3 = inlined_call_operand.hbm [shape: f32[8,10], index: 3, kind: output, shape index: {}]
  %s4 = sld [smem:[#allocation0]]
  $region30: #{tpu_custom_call.1} parent=0
    _
  %s6 = ssub.s32 1, %s4
  %s7 = scalar_select 0, %s6, %s4
  $region1: #{tpu_custom_call.1} parent=0
    #allocation2 [shape = 'u8[4096]{0}', space=vmem, size = 0x1000, scoped, tag = 'input window, operand 0, single buffered']
    #allocation3 [shape = 's32[1]{0}', space=sflag, size = 0x4, scoped, tag = 'scoped memory for tpu_custom_call.1']
    #allocation4 [shape = 's32[1]{0}', space=sflag, size = 0x4, scoped, tag = 'scoped memory for tpu_custom_call.1']
    #allocation5 [shape = 'u8[512]{0}', space=vmem, size = 0x400, scoped, tag = 'input window, operand 1, single buffered']
    #allocation6 [shape = 's32[1]{0}', space=sflag, size = 0x4, scoped, tag = 'scoped memory for tpu_custom_call.1']
    #allocation7 [shape = 'u8[4096]{0}', space=vmem, size = 0x1000, scoped, tag = 'output window, operand 0, single buffered']
    %8 = vsyncpa [#allocation3], 0
    %9 = vsyncpa [#allocation6], 0
    %10 = vsyncpa [#allocation4], 0
    // Predicated region
    $region2: #{tpu_custom_call.1} parent=1 // pred_check
      _
    $region3: #{tpu_custom_call.1} parent=1 // pred_check_branch
      %12 = sbr.rel (0) target = $region5
    $region4: #{tpu_custom_call.1} parent=1 // pred_region
      %14 = vsyncadd [#allocation3], 0
      %s16 = sshll.u32 %s0, 4
      %s17 = int_to_ptr.hbm [resolvable:$true] %s16
      %s18 = sshll.u32 [#allocation2], 4
      %s19 = int_to_ptr.vmem [resolvable:$true] %s18
      %21 = dma.hbm_to_vmem [thread:$0]  %s17, 128, %s19, [#allocation3]
    $region5: #{tpu_custom_call.1} parent=1 // pred_fallthru
      _
    // Predicated region
    $region6: #{tpu_custom_call.1} parent=1 // pred_check
      _
    $region7: #{tpu_custom_call.1} parent=1 // pred_check_branch
      %23 = sbr.rel (0) target = $region9
    $region8: #{tpu_custom_call.1} parent=1 // pred_region
      %25 = vsyncadd [#allocation6], 0
      %s27 = sshll.u32 %s1, 4
      %s28 = int_to_ptr.hbm [resolvable:$true] %s27
      %s29 = sshll.u32 [#allocation5], 4
      %s30 = int_to_ptr.vmem [resolvable:$true] %s29
      %32 = dma.hbm_to_vmem [thread:$0]  %s28, 16, %s30, [#allocation6]
    $region9: #{tpu_custom_call.1} parent=1 // pred_fallthru
      _
    // Predicated region
    $region10: #{tpu_custom_call.1} parent=1 // pred_check
      _
    $region11: #{tpu_custom_call.1} parent=1 // pred_check_branch
      %34 = sbr.rel (0) target = $region13
    $region12: #{tpu_custom_call.1} parent=1 // pred_region
      _
    $region13: #{tpu_custom_call.1} parent=1 // pred_fallthru
      _
    // Predicated region
    $region14: #{tpu_custom_call.1} parent=1 // pred_check
      _
    $region15: #{tpu_custom_call.1} parent=1 // pred_check_branch
      %36 = sbr.rel (0) target = $region17
    $region16: #{tpu_custom_call.1} parent=1 // pred_region
      %38 = dma.done [#allocation3], 128
    $region17: #{tpu_custom_call.1} parent=1 // pred_fallthru
      _
    // Predicated region
    $region18: #{tpu_custom_call.1} parent=1 // pred_check
      _
    $region19: #{tpu_custom_call.1} parent=1 // pred_check_branch
      %40 = sbr.rel (0) target = $region21
    $region20: #{tpu_custom_call.1} parent=1 // pred_region
      %42 = dma.done [#allocation6], 16
    $region21: #{tpu_custom_call.1} parent=1 // pred_fallthru
      _
    %v43 = vld [vmem:[#allocation2] sm:$0xff]
    %vm44 = vcmask 80896
    %v45 = vsel %vm44, %v43, 0.0
    %46 = vadd.xlane.f32.xlu0 %v45
    %v47 = vpop.xlane.xlu0 %46
    %v48 = vmul.f32 %v47, 0.1
    %v49 = vmul.f32 %v43, %v43
    %v50 = vsel %vm44, %v49, 0.0
    %51 = vadd.xlane.f32.xlu0 %v50
    %v52 = vpop.xlane.xlu0 %51
    %v53 = vmul.f32 %v52, 0.1
    %v54 = vmul.f32 %v48, %v48
    %v55 = vsub.f32 %v53, %v54
    %v56 = vmax.f32 %v55, 0.0
    %v57 = vadd.f32 %v56, 1e-05
    %v58 = vrsqrt.pop %v57
    %v59 = vmul.f32 %v58, %v57
    %v60 = vmul.f32 %v59, %v58
    %v61 = vmul.f32 0.5, %v60
    %v62 = vsub.f32 1.5, %v61
    %v63 = vmul.f32 %v58, %v62
    %vm64 = vweird.f32 %v57
    %vm65 = vweird.f32 %v58
    %vm66 = vmor %vm64, %vm65
    %v67 = vsel %vm66, %v58, %v63
    %v68 = vld [vmem:[#allocation5] sm:$0x1]
    %v69 = vld [vmem:[%s2] sm:$0x1]
    %v71 = vperm.slane %v68, 0
    %v73 = vmul.f32 %v71, %v67
    %v74 = vmul.f32 %v48, %v73
    %v76 = vperm.slane %v69, 0
    %v78 = vsub.f32 %v76, %v74
    %v79 = vmul.f32 %v43, %v73
    %v80 = vadd.f32 %v79, %v78
    %81 = vst.msk [vmem:[#allocation7] sm:$0xff] %vm44, %v80
    // Predicated region
    $region22: #{tpu_custom_call.1} parent=1 // pred_check
      _
    $region23: #{tpu_custom_call.1} parent=1 // pred_check_branch
      %83 = sbr.rel (0) target = $region25
    $region24: #{tpu_custom_call.1} parent=1 // pred_region
      %85 = vsyncadd [#allocation4], 0
      %s87 = sshll.u32 [#allocation7], 4
      %s88 = int_to_ptr.vmem [resolvable:$true] %s87
      %s89 = sshll.u32 %s3, 4
      %s90 = int_to_ptr.hbm [resolvable:$true] %s89
      %92 = dma.vmem_to_hbm [thread:$0]  %s88, 128, %s90, [#allocation4]
    $region25: #{tpu_custom_call.1} parent=1 // pred_fallthru
      _
    // Predicated region
    $region26: #{tpu_custom_call.1} parent=1 // pred_check
      _
    $region27: #{tpu_custom_call.1} parent=1 // pred_check_branch
      %94 = sbr.rel (0) target = $region29
    $region28: #{tpu_custom_call.1} parent=1 // pred_region
      %96 = dma.done [#allocation4], 128
    $region29: #{tpu_custom_call.1} parent=1 // pred_fallthru
      _
    %97 = vsyncpa [#allocation3], 1
    %98 = vsyncpa [#allocation6], 1
    %99 = vsyncpa [#allocation4], 1

</llo_original>
